<compile_context>
chip_gen: v7x
topology: tpu7x:2x2x1
jax: 0.10.0
libtpu: 0.0.40
codegen_flags: <defaults>
</compile_context>

<pallas_src>
import jax
import jax.numpy as jnp
from jax import lax
from jax.experimental import pallas as pl
from jax.experimental.pallas import tpu as pltpu

BN_EPS = 1e-5


def _dis_transition_kernel(x_ref, scale_ref, shift_ref, w_ref, o_ref):
    """One (image, H-row-tile) grid step.

    x_ref:     (h_block, Wo, 2C)  activations; channel axis holds both W-pool taps
    scale_ref: (1, 2C)            folded BN scale (per channel, duplicated per W tap), f32
    shift_ref: (1, 2C)            folded BN shift, f32
    w_ref:     (Cout, 2C)         1x1 conv weight, duplicated per W tap, 0.25 pool folded in
    o_ref:     (Cout, hb2*Wo)     pooled + convolved rows, spatial on the lane dim
    """
    x = x_ref[...].astype(jnp.float32)
    # Folded BN + ReLU on the VPU, f32.
    y = jnp.maximum(x * scale_ref[...] + shift_ref[...], 0.0)            # (h, Wo, 2C)
    h, wo, c2 = y.shape
    # 2x2 average pool: the W-pair sum happens inside the matmul contraction (both taps
    # live on the channel axis and share the conv weight); only the H-pair sum remains.
    y4 = y.reshape(h // 2, 2, wo, c2)                                    # free leading-dim split
    p = y4[:, 0] + y4[:, 1]                                              # (hb2, Wo, 2C) slab add
    p2 = p.reshape((h // 2) * wo, c2).astype(w_ref.dtype)                # collapse leading dims
    # (Cout, 2C) x (rows, 2C)^T -> (Cout, rows): lane-dense output, f32 accumulation on MXU.
    out = lax.dot_general(w_ref[...], p2,
                          dimension_numbers=(((1,), (1,)), ((), ())),
                          preferred_element_type=jnp.float32)
    o_ref[...] = out.astype(o_ref.dtype)


def _choose_h_block(H, Wo, C2, N, act_bytes, *, input_tile_budget_bytes=12 << 20):
    """Pick the H extent of a row tile.

    Constraints:
      * h even, H % h == 0                    (2x2 pool, full coverage)
      * (h//2 * Wo) % 128 == 0 or h == H      (output block's last dim must be a multiple
                                               of 128 unless it spans the full Ho*Wo axis)
    Preference: the largest tile fitting the input budget (longer contiguous DMAs, fewer
    grid steps).  Only split further when that would otherwise leave < 2 total grid steps
    (megacore on v7x needs two parallel steps; extra splits on v5e/v6e are pure overhead).
    """
    Ho = H // 2
    candidates = [h for h in range(2, H + 1, 2)
                  if H % h == 0 and (h == H or ((h // 2) * Wo) % 128 == 0)]
    fitting = [h for h in candidates if h * Wo * C2 * act_bytes <= input_tile_budget_bytes]
    # If nothing fits the budget, take the smallest legal tile (best effort for huge W*C).
    h = max(fitting) if fitting else min(candidates)
    if N * (Ho // (h // 2)) < 2:            # only possible when N == 1
        smaller = [c for c in fitting if c < h]
        if smaller:
            h = max(smaller)
    return h


def dis_transition_forward(x_nchw, gamma, beta, running_mean, running_var, conv_w,
                           *, h_block=None,
                           activation_dtype=jnp.bfloat16,
                           matmul_dtype=jnp.bfloat16):
    """x_nchw: (N, C, H, W) f32.  conv_w: (Cout, C) (1x1 conv weight squeezed, bias=False).

    Eval-mode BatchNorm only (running statistics folded into scale/shift).
    """
    N, C, H, W = x_nchw.shape
    assert H % 2 == 0 and W % 2 == 0, "avg_pool2d(2): H and W must be even here"
    Cout = conv_w.shape[0]
    Ho, Wo = H // 2, W // 2
    C2 = 2 * C

    # Fold inference-mode BatchNorm into a per-channel scale/shift, duplicated across the
    # two W-pooling taps that share the channel axis after the (W, C) -> (Wo, 2C) reshape.
    scale = gamma / jnp.sqrt(running_var + BN_EPS)                       # (C,)
    shift = beta - running_mean * scale                                  # (C,)
    scale2 = jnp.concatenate([scale, scale]).reshape(1, C2).astype(jnp.float32)
    shift2 = jnp.concatenate([shift, shift]).reshape(1, C2).astype(jnp.float32)
    # 1x1 conv weight duplicated per W tap, with the 0.25 pooling factor folded in.
    w2 = (0.25 * jnp.concatenate([conv_w, conv_w], axis=1)).astype(matmul_dtype)  # (Cout, 2C)

    act_bytes = jnp.dtype(activation_dtype).itemsize
    if h_block is None:
        h_block = _choose_h_block(H, Wo, C2, N, act_bytes)
    assert h_block % 2 == 0 and H % h_block == 0
    hb2 = h_block // 2
    n_row_tiles = Ho // hb2
    assert n_row_tiles == 1 or (hb2 * Wo) % 128 == 0

    # VMEM accounting: double-buffered input + output tiles plus grid-invariant params.
    in_tile = h_block * Wo * C2 * act_bytes
    out_tile = Cout * hb2 * Wo * 4
    params = Cout * C2 * jnp.dtype(matmul_dtype).itemsize + 2 * C2 * 4
    vmem_est = 2 * in_tile + 2 * out_tile + params
    vmem_limit = int(min(48 << 20, max(32 << 20, 2 * vmem_est)))

    # NCHW -> NHWC (XLA glue), cast to the activation dtype (halves the dominant HBM
    # read), then a free reshape folding the two W-pooling taps into a 2C channel axis.
    x3 = jnp.transpose(x_nchw, (0, 2, 3, 1)).astype(activation_dtype).reshape(N, H, Wo, C2)

    out_flat = pl.pallas_call(
        _dis_transition_kernel,
        out_shape=jax.ShapeDtypeStruct((N, Cout, Ho * Wo), jnp.float32),
        grid_spec=pltpu.PrefetchScalarGridSpec(
            num_scalar_prefetch=0,
            grid=(N, n_row_tiles),
            in_specs=[
                # One fully contiguous (h_block * W * C)-element DMA per grid step.
                pl.BlockSpec((None, h_block, Wo, C2), lambda n, t: (n, t, 0, 0)),
                pl.BlockSpec((1, C2), lambda n, t: (0, 0)),       # BN scale (grid-invariant)
                pl.BlockSpec((1, C2), lambda n, t: (0, 0)),       # BN shift (grid-invariant)
                pl.BlockSpec((Cout, C2), lambda n, t: (0, 0)),    # conv weight (grid-invariant)
            ],
            out_specs=pl.BlockSpec((None, Cout, hb2 * Wo), lambda n, t: (n, 0, t)),
        ),
        compiler_params=pltpu.CompilerParams(
            dimension_semantics=("parallel", "parallel"),
            vmem_limit_bytes=vmem_limit),
    )(x3, scale2, shift2, w2)

    # (N, Cout, Ho*Wo) -> (N, Cout, Ho, Wo): free reshape, no transpose needed.
    return out_flat.reshape(N, Cout, Ho, Wo)


def _reference_forward(x, gamma, beta, mean, var, conv_w):
    """Pure-JAX NCHW reference mirroring the PyTorch module (eval-mode BN)."""
    xh = (x - mean[None, :, None, None]) / jnp.sqrt(var[None, :, None, None] + BN_EPS)
    y = jnp.maximum(xh * gamma[None, :, None, None] + beta[None, :, None, None], 0.0)
    z = jnp.einsum("nchw,oc->nohw", y, conv_w)               # 1x1 conv, no bias
    Nn, Co, H, W = z.shape
    return z.reshape(Nn, Co, H // 2, 2, W // 2, 2).mean(axis=(3, 5))


if __name__ == "__main__":
    # Small shapes consistent with the module: N=2, C=4, H=W=16, Cout=8.
    N, C, H, W, Cout = 2, 4, 16, 16, 8

    key = jax.random.PRNGKey(0)
    kx, kw = jax.random.split(key)
    x = jax.random.normal(kx, (N, C, H, W), dtype=jnp.float32)
    conv_w = jax.random.normal(kw, (Cout, C), dtype=jnp.float32) * 0.2  # (Cout, C, 1, 1) squeezed

    # Deterministic BatchNorm parameters / running statistics.
    gamma = 1.0 + 0.1 * jnp.arange(C, dtype=jnp.float32)
    beta = 0.05 * jnp.arange(C, dtype=jnp.float32)
    running_mean = 0.1 * jnp.arange(C, dtype=jnp.float32)
    running_var = 1.0 + 0.2 * jnp.arange(C, dtype=jnp.float32)

    ref = _reference_forward(x, gamma, beta, running_mean, running_var, conv_w)

    # Full-f32 path: tight check against the pure-JAX reference.
    out_f32 = dis_transition_forward(x, gamma, beta, running_mean, running_var, conv_w,
                                     activation_dtype=jnp.float32,
                                     matmul_dtype=jnp.float32)
    out_f32 = jax.block_until_ready(out_f32)
    assert out_f32.shape == (N, Cout, H // 2, W // 2)
    assert jnp.allclose(out_f32, ref, atol=1e-5, rtol=1e-5)

    # Default path: bf16 activations + bf16 matmul operands (f32 accumulate) -> loose check.
    out_bf16 = dis_transition_forward(x, gamma, beta, running_mean, running_var, conv_w)
    out_bf16 = jax.block_until_ready(out_bf16)
    assert out_bf16.shape == (N, Cout, H // 2, W // 2)
    assert jnp.allclose(out_bf16, ref, atol=1e-1, rtol=1e-1)

    print("KERNEL_OK")
</pallas_src>

<mosaic_0001>
module attributes {stable_mosaic.version = 11 : i64} {
  func.func @_dis_transition_kernel(%arg0: i32, %arg1: i32, %arg2: memref<1x16x8x8xf32, #tpu.memory_space<vmem>>, %arg3: memref<1x8xf32, #tpu.memory_space<vmem>>, %arg4: memref<1x8xf32, #tpu.memory_space<vmem>>, %arg5: memref<8x8xf32, #tpu.memory_space<vmem>>, %arg6: memref<1x8x64xf32, #tpu.memory_space<vmem>>) attributes {dimension_semantics = [#tpu.dimension_semantics<parallel>, #tpu.dimension_semantics<parallel>], iteration_bounds = array<i64: 2, 1>, scalar_prefetch = 0 : i64, scratch_operands = 0 : i64, tpu.core_type = #tpu.core_type<tc>, window_params = [{transform_indices = @transform_0, window_bounds = array<i64: 1, 16, 8, 8>}, {pipeline_mode = #tpu.pipeline_mode<synchronous>, transform_indices = @transform_1, window_bounds = array<i64: 1, 8>}, {pipeline_mode = #tpu.pipeline_mode<synchronous>, transform_indices = @transform_2, window_bounds = array<i64: 1, 8>}, {pipeline_mode = #tpu.pipeline_mode<synchronous>, transform_indices = @transform_3, window_bounds = array<i64: 8, 8>}, {transform_indices = @transform_4, window_bounds = array<i64: 1, 8, 64>}]} {
    %c0 = arith.constant 0 : index
    %c0_0 = arith.constant 0 : index
    %c0_1 = arith.constant 0 : index
    %c0_2 = arith.constant 0 : index
    %0 = vector.load %arg2[%c0, %c0_0, %c0_1, %c0_2] : memref<1x16x8x8xf32, #tpu.memory_space<vmem>>, vector<1x16x8x8xf32>
    %1 = vector.shape_cast %0 : vector<1x16x8x8xf32> to vector<16x8x8xf32>
    %c0_3 = arith.constant 0 : index
    %c0_4 = arith.constant 0 : index
    %2 = vector.load %arg3[%c0_3, %c0_4] : memref<1x8xf32, #tpu.memory_space<vmem>>, vector<1x8xf32>
    %3 = vector.shape_cast %2 : vector<1x8xf32> to vector<1x1x8xf32>
    %4 = vector.broadcast %3 : vector<1x1x8xf32> to vector<16x8x8xf32>
    %5 = arith.mulf %1, %4 : vector<16x8x8xf32>
    %c0_5 = arith.constant 0 : index
    %c0_6 = arith.constant 0 : index
    %6 = vector.load %arg4[%c0_5, %c0_6] : memref<1x8xf32, #tpu.memory_space<vmem>>, vector<1x8xf32>
    %7 = vector.shape_cast %6 : vector<1x8xf32> to vector<1x1x8xf32>
    %8 = vector.broadcast %7 : vector<1x1x8xf32> to vector<16x8x8xf32>
    %9 = arith.addf %5, %8 : vector<16x8x8xf32>
    %cst = arith.constant 0.000000e+00 : f32
    %10 = vector.broadcast %cst : f32 to vector<16x8x8xf32>
    %11 = arith.maximumf %9, %10 : vector<16x8x8xf32>
    %12 = vector.shape_cast %11 : vector<16x8x8xf32> to vector<8x2x8x8xf32>
    %13 = vector.extract_strided_slice %12 {offsets = [0, 0, 0, 0], sizes = [8, 1, 8, 8], strides = [1, 1, 1, 1]} : vector<8x2x8x8xf32> to vector<8x1x8x8xf32>
    %14 = vector.shape_cast %13 : vector<8x1x8x8xf32> to vector<8x8x8xf32>
    %15 = vector.extract_strided_slice %12 {offsets = [0, 1, 0, 0], sizes = [8, 1, 8, 8], strides = [1, 1, 1, 1]} : vector<8x2x8x8xf32> to vector<8x1x8x8xf32>
    %16 = vector.shape_cast %15 : vector<8x1x8x8xf32> to vector<8x8x8xf32>
    %17 = arith.addf %14, %16 : vector<8x8x8xf32>
    %18 = vector.shape_cast %17 : vector<8x8x8xf32> to vector<64x8xf32>
    %c0_7 = arith.constant 0 : index
    %c0_8 = arith.constant 0 : index
    %19 = vector.load %arg5[%c0_7, %c0_8] : memref<8x8xf32, #tpu.memory_space<vmem>>, vector<8x8xf32>
    %cst_9 = arith.constant dense<0.000000e+00> : vector<8x64xf32>
    %20 = tpu.matmul %19, %18, %cst_9 {dimension_numbers = #tpu.dot_dimension_numbers<[1], [1], [0], [0], [0, 0, 1, 0], [], []>} : vector<8x8xf32>, vector<64x8xf32>, vector<8x64xf32> -> vector<8x64xf32>
    %c0_10 = arith.constant 0 : index
    %c0_11 = arith.constant 0 : index
    %c0_12 = arith.constant 0 : index
    %21 = vector.load %arg6[%c0_10, %c0_11, %c0_12] : memref<1x8x64xf32, #tpu.memory_space<vmem>>, vector<1x8x64xf32>
    %22 = vector.shape_cast %21 : vector<1x8x64xf32> to vector<8x64xf32>
    %23 = vector.shape_cast %20 : vector<8x64xf32> to vector<1x8x64xf32>
    tpu.vector_store %arg6[%c0_10, %c0_11, %c0_12], %23 {strides = array<i32>} : memref<1x8x64xf32, #tpu.memory_space<vmem>>, vector<1x8x64xf32>,
    return
  }
  func.func @transform_0(%arg0: i32, %arg1: i32) -> (i32, i32, i32, i32) {
    %c0_i32 = arith.constant 0 : i32
    %c0_i32_0 = arith.constant 0 : i32
    %c0_i32_1 = arith.constant 0 : i32
    return %arg0, %arg1, %c0_i32, %c0_i32_0 : i32, i32, i32, i32
  }
  func.func @transform_1(%arg0: i32, %arg1: i32) -> (i32, i32) {
    %c0_i32 = arith.constant 0 : i32
    %c0_i32_0 = arith.constant 0 : i32
    %c0_i32_1 = arith.constant 0 : i32
    return %c0_i32, %c0_i32_0 : i32, i32
  }
  func.func @transform_2(%arg0: i32, %arg1: i32) -> (i32, i32) {
    %c0_i32 = arith.constant 0 : i32
    %c0_i32_0 = arith.constant 0 : i32
    %c0_i32_1 = arith.constant 0 : i32
    return %c0_i32, %c0_i32_0 : i32, i32
  }
  func.func @transform_3(%arg0: i32, %arg1: i32) -> (i32, i32) {
    %c0_i32 = arith.constant 0 : i32
    %c0_i32_0 = arith.constant 0 : i32
    %c0_i32_1 = arith.constant 0 : i32
    return %c0_i32, %c0_i32_0 : i32, i32
  }
  func.func @transform_4(%arg0: i32, %arg1: i32) -> (i32, i32, i32) {
    %c0_i32 = arith.constant 0 : i32
    %c0_i32_0 = arith.constant 0 : i32
    return %arg0, %c0_i32, %arg1 : i32, i32, i32
  }
}

</mosaic_0001>

<llo_original>
// kernel: tpu_custom_call.1
$region0: #{tpu_custom_call.1}
  #allocation0 [shape = 'u32[]', space=smem, size = 0x4, offset = 0x4, fixed_abs, tag = 'smem constant byte address 0x4 - core index']
  #allocation1 [shape = 'u32[144,128]{1,0:T(1,128)}', space=vmem, size = 0x12000, scoped, tag = 'internal scratch']
  %s0 = inlined_call_operand.vmem [shape: f32[2,16,8,8], index: 0, kind: input, shape index: {}]
  %s1 = inlined_call_operand.vmem [shape: f32[1,8], index: 1, kind: input, shape index: {}]
  %s2 = inlined_call_operand.vmem [shape: f32[1,8], index: 2, kind: input, shape index: {}]
  %s3 = inlined_call_operand.vmem [shape: f32[8,8], index: 3, kind: input, shape index: {}]
  %s4 = inlined_call_operand.hbm [shape: f32[2,8,64], index: 4, kind: output, shape index: {}]
  %s5 = sld [smem:[#allocation0]]
  $region49: #{tpu_custom_call.1} parent=0
    _
  %s7 = ssub.s32 1, %s5
  %s8 = scalar_select 0, %s7, %s5
  $region1: #{tpu_custom_call.1} parent=0
    #allocation2 [shape = 'u8[8192]{0}', space=vmem, size = 0x2000, scoped, tag = 'output window, operand 0']
    #allocation3 [shape = 's32[2]{0}', space=sflag, size = 0x8, scoped, tag = 'scoped memory for tpu_custom_call.1']
    %9 = vsyncpa [#allocation3], 0
    %s10 = scalar_lea.sflag [#allocation3], 1
    %11 = vsyncpa %s10, 0
    loop: start=0, step=1, limit=4
    $region2: #{tpu_custom_call.1} parent=1 // loop_pre_header
      _
    $region3: #{tpu_custom_call.1} parent=1 // loop_header
      %s13 = sphi 0, %s17
      %p14 = scmp.ge.s32.totalorder %s13, 4
      %s20 = sphi 0, %s32
      %s21 = sphi 0, %s28
      %s22 = sphi 0, %s20
      %s23 = sphi 0, %s21
      %s24 = sphi 0, %s22
      %s25 = sphi 0, %s23
      %s37 = sphi 0, %s39
      %s40 = sphi 0, %s37
      %s41 = sphi 0, %s40
      %s57 = sphi 0, %s41
      %s61 = sphi 0, %s61
      %s63 = sphi 0, %s61
      %s64 = sphi 0, %s63
      %s78 = sphi 0, %s64
      %s82 = sphi 0, %s82
      %s84 = sphi 0, %s82
      %s85 = sphi 0, %s84
      %s99 = sphi 0, %s85
      %s103 = sphi 0, %s103
      %s105 = sphi 0, %s103
      %s106 = sphi 0, %s105
      %s120 = sphi 0, %s106
      %s128 = sphi 0, %s130
      %s131 = sphi 0, %s128
      %s132 = sphi 0, %s131
      %s148 = sphi 0, %s132
    $region4: #{tpu_custom_call.1} parent=1 // loop_header_branch
      %16 = sbr.rel (%p14) target = $region8
    $region5: #{tpu_custom_call.1} parent=1 // loop_body
      %s18 = ssub.s32 %s13, 1
      %s19 = ssub.s32 %s13, 2
      %s26 = sadd.s32 1, %s21
      %p27 = scmp.ge.s32.totalorder %s26, 1
      %s28 = scalar_select %p27, 0, %s26
      %s29 = sadd.s32 1, %s20
      %s30 = scalar_select %p27, %s29, %s20
      %p31 = scmp.ge.s32.totalorder %s30, 2
      %s32 = scalar_select %p31, 0, %s30
      %s33 = ssub.s32 %s20, %s32
      %s34 = ssub.s32 %s21, %s28
      %s35 = sor.u32 %s33, %s34
      %p36 = scmp.eq.s32.totalorder %s35, 0
      %s38 = sadd.s32 %s37, 1
      %s39 = scalar_select %p36, %s37, %s38
      %p42 = pneg %p36
      %p43 = scmp.eq.s32.totalorder %s13, 1
      %p44 = por %p42, %p43
      %p45 = scmp.ne.s32.totalorder %s37, %s40
      %p46 = scmp.eq.s32.totalorder %s13, 0
      %p47 = por %p45, %p46
      %p48 = scmp.ne.s32.totalorder %s37, %s40
      %p49 = scmp.eq.s32.totalorder %s18, 1
      %p50 = por %p48, %p49
      %p51 = scmp.ne.s32.totalorder %s40, %s41
      %p52 = scmp.eq.s32.totalorder %s18, 0
      %p53 = por %p51, %p52
      %p54 = scmp.ne.s32.totalorder %s40, %s41
      %p55 = scmp.eq.s32.totalorder %s19, 1
      %p56 = por %p54, %p55
      %p58 = scmp.ne.s32.totalorder %s41, %s57
      %p59 = scmp.eq.s32.totalorder %s19, 0
      %p60 = por %p58, %p59
      %s62 = sadd.s32 %s61, 1
      %p65 = scmp.eq.s32.totalorder %s13, 1
      %p66 = scmp.ne.s32.totalorder %s61, %s63
      %p67 = scmp.eq.s32.totalorder %s13, 0
      %p68 = por %p66, %p67
      %p69 = scmp.ne.s32.totalorder %s61, %s63
      %p70 = scmp.eq.s32.totalorder %s18, 1
      %p71 = por %p69, %p70
      %p72 = scmp.ne.s32.totalorder %s63, %s64
      %p73 = scmp.eq.s32.totalorder %s18, 0
      %p74 = por %p72, %p73
      %p75 = scmp.ne.s32.totalorder %s63, %s64
      %p76 = scmp.eq.s32.totalorder %s19, 1
      %p77 = por %p75, %p76
      %p79 = scmp.ne.s32.totalorder %s64, %s78
      %p80 = scmp.eq.s32.totalorder %s19, 0
      %p81 = por %p79, %p80
      %s83 = sadd.s32 %s82, 1
      %p86 = scmp.eq.s32.totalorder %s13, 1
      %p87 = scmp.ne.s32.totalorder %s82, %s84
      %p88 = scmp.eq.s32.totalorder %s13, 0
      %p89 = por %p87, %p88
      %p90 = scmp.ne.s32.totalorder %s82, %s84
      %p91 = scmp.eq.s32.totalorder %s18, 1
      %p92 = por %p90, %p91
      %p93 = scmp.ne.s32.totalorder %s84, %s85
      %p94 = scmp.eq.s32.totalorder %s18, 0
      %p95 = por %p93, %p94
      %p96 = scmp.ne.s32.totalorder %s84, %s85
      %p97 = scmp.eq.s32.totalorder %s19, 1
      %p98 = por %p96, %p97
      %p100 = scmp.ne.s32.totalorder %s85, %s99
      %p101 = scmp.eq.s32.totalorder %s19, 0
      %p102 = por %p100, %p101
      %s104 = sadd.s32 %s103, 1
      %p107 = scmp.eq.s32.totalorder %s13, 1
      %p108 = scmp.ne.s32.totalorder %s103, %s105
      %p109 = scmp.eq.s32.totalorder %s13, 0
      %p110 = por %p108, %p109
      %p111 = scmp.ne.s32.totalorder %s103, %s105
      %p112 = scmp.eq.s32.totalorder %s18, 1
      %p113 = por %p111, %p112
      %p114 = scmp.ne.s32.totalorder %s105, %s106
      %p115 = scmp.eq.s32.totalorder %s18, 0
      %p116 = por %p114, %p115
      %p117 = scmp.ne.s32.totalorder %s105, %s106
      %p118 = scmp.eq.s32.totalorder %s19, 1
      %p119 = por %p117, %p118
      %p121 = scmp.ne.s32.totalorder %s106, %s120
      %p122 = scmp.eq.s32.totalorder %s19, 0
      %p123 = por %p121, %p122
      %s124 = ssub.s32 %s20, %s32
      %s125 = ssub.s32 %s21, %s28
      %s126 = sor.u32 %s124, %s125
      %p127 = scmp.eq.s32.totalorder %s126, 0
      %s129 = sadd.s32 %s128, 1
      %s130 = scalar_select %p127, %s128, %s129
      %p133 = pneg %p127
      %p134 = scmp.eq.s32.totalorder %s13, 1
      %p135 = por %p133, %p134
      %p136 = scmp.ne.s32.totalorder %s128, %s131
      %p137 = scmp.eq.s32.totalorder %s13, 0
      %p138 = por %p136, %p137
      %p139 = scmp.ne.s32.totalorder %s128, %s131
      %p140 = scmp.eq.s32.totalorder %s18, 1
      %p141 = por %p139, %p140
      %p142 = scmp.ne.s32.totalorder %s131, %s132
      %p143 = scmp.eq.s32.totalorder %s18, 0
      %p144 = por %p142, %p143
      %p145 = scmp.ne.s32.totalorder %s131, %s132
      %p146 = scmp.eq.s32.totalorder %s19, 1
      %p147 = por %p145, %p146
      %p149 = scmp.ne.s32.totalorder %s132, %s148
      %p150 = scmp.eq.s32.totalorder %s19, 0
      %p151 = por %p149, %p150
      %p152 = scmp.le.s32.totalorder 1, %s13
      %p153 = scmp.lt.s32.totalorder %s13, 3
      %p154 = pnand %p152, %p153
      %p155 = pneg %p154
      // Predicated region
      $region9: #{tpu_custom_call.1} parent=5 // pred_check
        _
      $region10: #{tpu_custom_call.1} parent=5 // pred_check_branch
        %157 = sbr.rel (%p154) target = $region12
      $region11: #{tpu_custom_call.1} parent=5 // pred_region
        %s158 = ssub.s32 %s13, 1
        // Predicated region
        $region13: #{tpu_custom_call.1} parent=11 // pred_check
          %p159 = pneg %p74
        $region14: #{tpu_custom_call.1} parent=11 // pred_check_branch
          %161 = sbr.rel (%p159) target = $region16
        $region15: #{tpu_custom_call.1} parent=11 // pred_region
          _
        $region16: #{tpu_custom_call.1} parent=11 // pred_fallthru
          _
        // Predicated region
        $region17: #{tpu_custom_call.1} parent=11 // pred_check
          %p162 = pneg %p95
        $region18: #{tpu_custom_call.1} parent=11 // pred_check_branch
          %164 = sbr.rel (%p162) target = $region20
        $region19: #{tpu_custom_call.1} parent=11 // pred_region
          _
        $region20: #{tpu_custom_call.1} parent=11 // pred_fallthru
          _
        // Predicated region
        $region21: #{tpu_custom_call.1} parent=11 // pred_check
          %p165 = pneg %p116
        $region22: #{tpu_custom_call.1} parent=11 // pred_check_branch
          %167 = sbr.rel (%p165) target = $region24
        $region23: #{tpu_custom_call.1} parent=11 // pred_region
          _
        $region24: #{tpu_custom_call.1} parent=11 // pred_fallthru
          _
      $region12: #{tpu_custom_call.1} parent=5 // pred_fallthru
        _
      %p168 = scmp.lt.s32.totalorder %s13, 2
      // Predicated region
      $region25: #{tpu_custom_call.1} parent=5 // pred_check
        %p169 = pneg %p168
      $region26: #{tpu_custom_call.1} parent=5 // pred_check_branch
        %171 = sbr.rel (%p169) target = $region28
      $region27: #{tpu_custom_call.1} parent=5 // pred_region
        // Predicated region
        $region29: #{tpu_custom_call.1} parent=27 // pred_check
          %p172 = pneg %p47
        $region30: #{tpu_custom_call.1} parent=27 // pred_check_branch
          %174 = sbr.rel (%p172) target = $region32
        $region31: #{tpu_custom_call.1} parent=27 // pred_region
          %s175 = smul.u32 16, %s21
          %p176 = scmp.lt.s32.totalorder %s20, 1
          %s177 = scalar_select %p176, %s20, 1
          %p178 = scmp.lt.s32.totalorder %s175, 15
          %s179 = scalar_select %p178, %s175, 15
          %s180 = smul.addr %s177, 16
          %s181 = sadd.s32 %s179, %s180
          %s182 = smul.addr %s181, 8
          %s183 = scalar_lea.vmem %s0, %s182
          %s184 = smul.u32 16, %s21
        $region32: #{tpu_custom_call.1} parent=27 // pred_fallthru
          _
      $region28: #{tpu_custom_call.1} parent=5 // pred_fallthru
        _
      %p185 = scmp.le.s32.totalorder 1, %s13
      %p186 = scmp.lt.s32.totalorder %s13, 3
      %p187 = pnand %p185, %p186
      %p188 = pneg %p187
      // Predicated region
      $region33: #{tpu_custom_call.1} parent=5 // pred_check
        _
      $region34: #{tpu_custom_call.1} parent=5 // pred_check_branch
        %190 = sbr.rel (%p187) target = $region36
      $region35: #{tpu_custom_call.1} parent=5 // pred_region
        %s191 = ssub.s32 %s13, 1
        %s192 = smul.u32 16, %s23
        %p193 = scmp.lt.s32.totalorder %s22, 1
        %s194 = scalar_select %p193, %s22, 1
        %p195 = scmp.lt.s32.totalorder %s192, 15
        %s196 = scalar_select %p195, %s192, 15
        %s197 = smul.addr %s194, 16
        %s198 = sadd.s32 %s196, %s197
        %s199 = smul.addr %s198, 8
        %s200 = scalar_lea.vmem %s0, %s199
        %p201 = pneg %p53
        %p202 = pneg %p50
        %p203 = pneg %p74
        %p204 = pneg %p71
        %p205 = pneg %p95
        %p206 = pneg %p92
        %p207 = pneg %p116
        %p208 = pneg %p113
        %p209 = pneg %p144
        %p210 = pneg %p141
        %s211 = sand.u32 %s131, 1
        %s212 = scalar_lea.sflag [#allocation3], %s211
        %s213 = sand.u32 %s131, 1
        %s214 = smul.addr %s213, 8
        %s215 = scalar_lea.vmem [#allocation2], %s214
        %s216 = smul.u32 16, %s23
        %p217 = scmp.lt.s32.totalorder %s22, 1
        %s218 = scalar_select %p217, %s22, 1
        %p219 = scmp.lt.s32.totalorder %s216, 15
        %s220 = scalar_select %p219, %s216, 15
        %s221 = smul.addr %s218, 16
        %s222 = sadd.s32 %s220, %s221
        %s223 = smul.addr %s222, 8
        %s224 = scalar_lea.vmem %s0, %s223
        %s225 = smul.u32 16, %s23
        %v226 = vld [vmem:[%s224] sm:$0xff]
        %v227 = vld [vmem:[%s224 + $0x8] sm:$0xff]
        %v228 = vld [vmem:[%s224 + $0x10] sm:$0xff]
        %v229 = vld [vmem:[%s224 + $0x18] sm:$0xff]
        %v230 = vld [vmem:[%s224 + $0x20] sm:$0xff]
        %v231 = vld [vmem:[%s224 + $0x28] sm:$0xff]
        %v232 = vld [vmem:[%s224 + $0x30] sm:$0xff]
        %v233 = vld [vmem:[%s224 + $0x38] sm:$0xff]
        %v234 = vld [vmem:[%s224 + $0x40] sm:$0xff]
        %v235 = vld [vmem:[%s224 + $0x48] sm:$0xff]
        %v236 = vld [vmem:[%s224 + $0x50] sm:$0xff]
        %v237 = vld [vmem:[%s224 + $0x58] sm:$0xff]
        %v238 = vld [vmem:[%s224 + $0x60] sm:$0xff]
        %v239 = vld [vmem:[%s224 + $0x68] sm:$0xff]
        %v240 = vld [vmem:[%s224 + $0x70] sm:$0xff]
        %v241 = vld [vmem:[%s224 + $0x78] sm:$0xff]
        %v242 = vld [vmem:[%s1] sm:$0x1]
        %v244 = vlaneseq
        %v245 = vshrl.u32 %v244, 7
        %v246 = vsub.s32 0, %v245
        %v247 = vrot.slane %v242, %v246
        %v249 = vmul.f32 %v226, %v247
        %v250 = vmul.f32 %v227, %v247
        %v251 = vmul.f32 %v228, %v247
        %v252 = vmul.f32 %v229, %v247
        %v253 = vmul.f32 %v230, %v247
        %v254 = vmul.f32 %v231, %v247
        %v255 = vmul.f32 %v232, %v247
        %v256 = vmul.f32 %v233, %v247
        %v257 = vmul.f32 %v234, %v247
        %v258 = vmul.f32 %v235, %v247
        %v259 = vmul.f32 %v236, %v247
        %v260 = vmul.f32 %v237, %v247
        %v261 = vmul.f32 %v238, %v247
        %v262 = vmul.f32 %v239, %v247
        %v263 = vmul.f32 %v240, %v247
        %v264 = vmul.f32 %v241, %v247
        %v265 = vld [vmem:[%s2] sm:$0x1]
        %v267 = vlaneseq
        %v268 = vshrl.u32 %v267, 7
        %v269 = vsub.s32 0, %v268
        %v270 = vrot.slane %v265, %v269
        %v272 = vadd.f32 %v249, %v270
        %v273 = vadd.f32 %v250, %v270
        %v274 = vadd.f32 %v251, %v270
        %v275 = vadd.f32 %v252, %v270
        %v276 = vadd.f32 %v253, %v270
        %v277 = vadd.f32 %v254, %v270
        %v278 = vadd.f32 %v255, %v270
        %v279 = vadd.f32 %v256, %v270
        %v280 = vadd.f32 %v257, %v270
        %v281 = vadd.f32 %v258, %v270
        %v282 = vadd.f32 %v259, %v270
        %v283 = vadd.f32 %v260, %v270
        %v284 = vadd.f32 %v261, %v270
        %v285 = vadd.f32 %v262, %v270
        %v286 = vadd.f32 %v263, %v270
        %v287 = vadd.f32 %v264, %v270
        %v288 = vmax.f32 %v272, 0.0
        %v289 = vmax.f32 %v273, 0.0
        %v290 = vmax.f32 %v274, 0.0
        %v291 = vmax.f32 %v275, 0.0
        %v292 = vmax.f32 %v276, 0.0
        %v293 = vmax.f32 %v277, 0.0
        %v294 = vmax.f32 %v278, 0.0
        %v295 = vmax.f32 %v279, 0.0
        %v296 = vmax.f32 %v280, 0.0
        %v297 = vmax.f32 %v281, 0.0
        %v298 = vmax.f32 %v282, 0.0
        %v299 = vmax.f32 %v283, 0.0
        %v300 = vmax.f32 %v284, 0.0
        %v301 = vmax.f32 %v285, 0.0
        %v302 = vmax.f32 %v286, 0.0
        %v303 = vmax.f32 %v287, 0.0
        %v304 = vadd.f32 %v288, %v289
        %v305 = vadd.f32 %v290, %v291
        %v306 = vadd.f32 %v292, %v293
        %v307 = vadd.f32 %v294, %v295
        %v308 = vadd.f32 %v296, %v297
        %v309 = vadd.f32 %v298, %v299
        %v310 = vadd.f32 %v300, %v301
        %v311 = vadd.f32 %v302, %v303
        %v312 = vld [vmem:[%s3] sm:$0xff]
        %vm313 = vcmask 64512
        %v315 = vsel %vm313, %v312, 0
        %v318 = vsel %vm313, %v304, 0
        %v321 = vsel %vm313, %v305, 0
        %v324 = vsel %vm313, %v306, 0
        %v327 = vsel %vm313, %v307, 0
        %v330 = vsel %vm313, %v308, 0
        %v333 = vsel %vm313, %v309, 0
        %v336 = vsel %vm313, %v310, 0
        %v339 = vsel %vm313, %v311, 0
        %341 = vmatprep.subr.mxu0 0.0
        %342 = vmatpush1.xpose.msra.mxu0 %v318
        %343 = vmatprep.subr.mxu0 0.0
        %344 = vmatpush1.xpose.msra.mxu0 %v321
        %345 = vmatprep.subr.mxu0 0.0
        %346 = vmatpush1.xpose.msra.mxu0 %v324
        %347 = vmatprep.subr.mxu0 0.0
        %348 = vmatpush1.xpose.msra.mxu0 %v327
        %349 = vmatprep.subr.mxu0 0.0
        %350 = vmatpush1.xpose.msra.mxu0 %v330
        %351 = vmatprep.subr.mxu0 0.0
        %352 = vmatpush1.xpose.msra.mxu0 %v333
        %353 = vmatprep.subr.mxu0 0.0
        %354 = vmatpush1.xpose.msra.mxu0 %v336
        %355 = vmatprep.subr.mxu0 0.0
        %356 = vmatpush1.xpose.msra.mxu0 %v339
        %357 = vmatprep.subr.mxu0 0.0
        %358 = vmatpush1.xpose.msra.mxu0 0.0
        %359 = vmatprep.subr.mxu0 0.0
        %360 = vmatpush1.xpose.msra.mxu0 0.0
        %361 = vmatprep.subr.mxu0 0.0
        %362 = vmatpush1.xpose.msra.mxu0 0.0
        %363 = vmatprep.subr.mxu0 0.0
        %364 = vmatpush1.xpose.msra.mxu0 0.0
        %365 = vmatprep.subr.mxu0 0.0
        %366 = vmatpush1.xpose.msra.mxu0 0.0
        %367 = vmatprep.subr.mxu0 0.0
        %368 = vmatpush1.xpose.msra.mxu0 0.0
        %369 = vmatprep.subr.mxu0 0.0
        %370 = vmatpush1.xpose.msra.mxu0 0.0
        %371 = vmatprep.subr.mxu0 0.0
        %372 = vmatpush1.xpose.msra.mxu0 0.0
        %373 = vmatprep.subr.mxu0 0.0
        %374 = vmatpush1.xpose.msra.mxu0 0.0
        %375 = vmatprep.subr.mxu0 0.0
        %376 = vmatpush1.xpose.msra.mxu0 0.0
        %377 = vmatprep.subr.mxu0 0.0
        %378 = vmatpush1.xpose.msra.mxu0 0.0
        %379 = vmatprep.subr.mxu0 0.0
        %380 = vmatpush1.xpose.msra.mxu0 0.0
        %381 = vmatprep.subr.mxu0 0.0
        %382 = vmatpush1.xpose.msra.mxu0 0.0
        %383 = vmatprep.subr.mxu0 0.0
        %384 = vmatpush1.xpose.msra.mxu0 0.0
        %385 = vmatprep.subr.mxu0 0.0
        %386 = vmatpush1.xpose.msra.mxu0 0.0
        %387 = vmatprep.subr.mxu0 0.0
        %388 = vmatpush1.xpose.msra.mxu0 0.0
        %389 = vmatprep.subr.mxu0 0.0
        %390 = vmatpush1.xpose.msra.mxu0 0.0
        %391 = vmatprep.subr.mxu0 0.0
        %392 = vmatpush1.xpose.msra.mxu0 0.0
        %393 = vmatprep.subr.mxu0 0.0
        %394 = vmatpush1.xpose.msra.mxu0 0.0
        %395 = vmatprep.subr.mxu0 0.0
        %396 = vmatpush1.xpose.msra.mxu0 0.0
        %397 = vmatprep.subr.mxu0 0.0
        %398 = vmatpush1.xpose.msra.mxu0 0.0
        %399 = vmatprep.subr.mxu0 0.0
        %400 = vmatpush1.xpose.msra.mxu0 0.0
        %401 = vmatprep.subr.mxu0 0.0
        %402 = vmatpush1.xpose.msra.mxu0 0.0
        %403 = vmatprep.subr.mxu0 0.0
        %404 = vmatpush1.xpose.msra.mxu0 0.0
        %405 = vmatprep.mubr.f32.mxu0 0.0
        %406 = vmatmul.mubr.f32.gmra.mrb[0].mxu0 %v315
        %v407 = vpop.f32.mrb[0].mxu0
        %v408 = vadd.f32 0.0, %v407
        %v409 = vpop.f32.mrb[0].mxu0
        %410 = vdwg.mxu0
        %vm411 = vcmask 523264
        %412 = vst.msk [vmem:[%s215] sm:$0xff] %vm411, %v408
        %s413 = sand.u32 %s131, 1
        %s414 = scalar_lea.sflag [#allocation3], %s413
        %s415 = sand.u32 %s131, 1
        %s416 = smul.addr %s415, 8
        %s417 = scalar_lea.vmem [#allocation2], %s416
        // Predicated region
        $region37: #{tpu_custom_call.1} parent=35 // pred_check
          %p418 = pneg %p141
        $region38: #{tpu_custom_call.1} parent=35 // pred_check_branch
          %420 = sbr.rel (%p418) target = $region40
        $region39: #{tpu_custom_call.1} parent=35 // pred_region
          %s422 = ssub.s32 128, 128
          %423 = vsyncadd %s414, %s422
          %s424 = sadd.s32 %s23, %s22
          %s425 = smul.addr %s424, 128
          %s426 = scalar_lea.hbm %s4, %s425
          %s428 = sshll.u32 %s417, 4
          %s429 = int_to_ptr.vmem [resolvable:$true] %s428
          %431 = dma.vmem_to_hbm [thread:$0]  %s429, 128, %s426, %s414
        $region40: #{tpu_custom_call.1} parent=35 // pred_fallthru
          _
      $region36: #{tpu_custom_call.1} parent=5 // pred_fallthru
        _
      %p432 = scmp.le.s32.totalorder 2, %s13
      // Predicated region
      $region41: #{tpu_custom_call.1} parent=5 // pred_check
        %p433 = pneg %p432
      $region42: #{tpu_custom_call.1} parent=5 // pred_check_branch
        %435 = sbr.rel (%p433) target = $region44
      $region43: #{tpu_custom_call.1} parent=5 // pred_region
        %s436 = ssub.s32 %s13, 2
        // Predicated region
        $region45: #{tpu_custom_call.1} parent=43 // pred_check
          %p437 = pneg %p147
        $region46: #{tpu_custom_call.1} parent=43 // pred_check_branch
          %439 = sbr.rel (%p437) target = $region48
        $region47: #{tpu_custom_call.1} parent=43 // pred_region
          %s440 = sand.u32 %s132, 1
          %s441 = scalar_lea.sflag [#allocation3], %s440
          %s442 = sand.u32 %s132, 1
          %s443 = smul.addr %s442, 8
          %s444 = scalar_lea.vmem [#allocation2], %s443
          %445 = dma.done %s441, 128
        $region48: #{tpu_custom_call.1} parent=43 // pred_fallthru
          _
      $region44: #{tpu_custom_call.1} parent=5 // pred_fallthru
        _
    $region6: #{tpu_custom_call.1} parent=1 // loop_footer
      %s17 = sadd.s32 1, %s13
    $region7: #{tpu_custom_call.1} parent=1 // loop_footer_branch
      %12 = sbr.rel target = $region3
    $region8: #{tpu_custom_call.1} parent=1 // loop_exit
      _
    %446 = vsyncpa [#allocation3], 1
    %s447 = scalar_lea.sflag [#allocation3], 1
    %448 = vsyncpa %s447, 1

</llo_original>
